<compile_context>
chip_gen: v5e
topology: v5e:2x2
jax: 0.10.0
libtpu: 0.0.40
codegen_flags: <defaults>
</compile_context>

<pallas_src>
import jax
import jax.numpy as jnp
from jax.experimental import pallas as pl
from jax.experimental.pallas import tpu as pltpu


def _cdiv(a, b):
    return (a + b - 1) // b


def _round_up(a, m):
    return _cdiv(a, m) * m


def fm_kernel(xt_ref, wh_ref, vt_ref, b_ref, out_ref):
    """One lane-dense batch tile of the FM forward pass (batch along lanes).

    xt_ref  : (n, TB)  VMEM   x transposed, pipelined over the batch grid
    wh_ref  : (n, 2)   VMEM   col 0 = linear weight w, col 1 = 0.5*sum_k V^2 (resident)
    vt_ref  : (k, n)   VMEM   V transposed (resident)
    b_ref   : (1, 1)   SMEM   linear bias scalar
    out_ref : (1, TB)  VMEM   sigmoid logits for this batch tile (dense lane store)
    """
    xt = xt_ref[...].astype(jnp.float32)      # upcast (no-op when streaming f32)
    w_col = wh_ref[:, 0:1]                    # (n, 1)
    h_col = wh_ref[:, 1:2]                    # (n, 1) == 0.5 * sum_k V^2
    b = b_ref[0, 0]                           # scalar from SMEM

    # Linear term and the hoisted "0.5*sum_k x^2 V^2" term share one fused VPU
    # pass over x followed by a single sublane (feature-axis) reduce:
    #   x@w.T + 0.5*sum_k((x^2)@(V^2)) == sum_j x_j * (w_j + h_j * x_j)
    lin_p2 = jnp.sum(xt * (w_col + h_col * xt), axis=0, keepdims=True)   # (1, TB)

    # The only MXU matmul: (k, n) @ (n, TB); then p1 = sum_k (V.T x)^2.
    xv = jnp.dot(vt_ref[...], xt, preferred_element_type=jnp.float32)    # (k, TB)
    p1 = jnp.sum(xv * xv, axis=0, keepdims=True)                          # (1, TB)

    out_ref[...] = jax.nn.sigmoid(lin_p2 - 0.5 * p1 + b)


def fm_forward(x, w, b, v, *, x_stream_dtype=jnp.float32, max_block_lanes=65536):
    """x: (B, n), w: (1, n), b: (1, 1) or (1,), v: (n, k) -> (B, 1) sigmoid logits."""
    x = jnp.asarray(x, jnp.float32)
    B, n = x.shape
    k = v.shape[1]

    w = jnp.asarray(w, jnp.float32).reshape(1, n)
    b = jnp.asarray(b, jnp.float32).reshape(1, 1)
    v = jnp.asarray(v, jnp.float32).reshape(n, k)

    # Resident per-feature params, 0.5 folded in the wrapper:
    #   wh[:, 0] = w,   wh[:, 1] = 0.5 * sum_k V^2
    wh = jnp.concatenate([w.T, 0.5 * jnp.sum(v * v, axis=1, keepdims=True)], axis=1)
    vt = v.T                                                # (k, n)

    # Batch lives along lanes: the transposed x streams lane-dense (no 128/n lane
    # waste for small n) and the output is a dense (1, TB) lane store per step.
    # (Callers that stream many batches can pre-transpose x once and skip this op.)
    xt = x.T.astype(x_stream_dtype)                         # (n, B)

    # ---------- VMEM-accurate batch-tile sizing (per TPU generation) ----------
    try:
        vmem_phys = int(pltpu.get_tpu_info().vmem_capacity_bytes)
    except Exception:
        vmem_phys = 64 << 20                                # v7x worst case
    vmem_limit = int(min(vmem_phys * 3 // 4, 100 << 20))    # ~96 MiB v5e/v6e, ~48 MiB v7x

    n8, k8 = _round_up(n, 8), _round_up(k, 8)
    # Resident params (lane-padded, double-buffered) + headroom for compiler scratch.
    resident = 2 * 4 * (n8 * 128 + k8 * _round_up(n, 128))
    headroom = 2 << 20
    # Conservative per-lane bytes: 2x x buffers + ~4x elementwise intermediates
    # + (k, TB) matmul result & square + reduction rows / out double buffer.
    bytes_per_lane = 4 * (6 * n8 + 2 * k8 + 32)
    budget = max(vmem_limit - resident - headroom, 128 * bytes_per_lane)
    tb_cap = max(128, min(max_block_lanes, (budget // bytes_per_lane) // 128 * 128))

    if B <= tb_cap:
        if B >= 4 * 128:
            # Split into >=2 grid steps so both TensorCores get work on v7x.
            tb = _round_up(_cdiv(B, 2), 128)
            grid = _cdiv(B, tb)
        else:
            tb, grid = B, 1                  # single full-extent block (any B)
    else:
        grid = _cdiv(B, tb_cap)
        tb = _round_up(_cdiv(B, grid), 128)  # balanced, 128-aligned lane tiles
        grid = _cdiv(B, tb)
    # No jnp.pad of x: the ragged last block reads out-of-range lanes (discarded),
    # and its garbage outputs land in the padded output row sliced off below.

    # TODO(synk): for very large feature widths n, add an "arbitrary" n-axis grid
    # dimension with VMEM accumulators so the x tile and resident V do not scale
    # with the full n; not needed for the module's default n=10.

    cost = pl.CostEstimate(
        flops=int(2 * B * n * k + 4 * B * n),
        transcendentals=int(B),
        bytes_accessed=int(xt.size * xt.dtype.itemsize
                           + 4 * (wh.size + vt.size + 1 + grid * tb)),
    )

    out = pl.pallas_call(
        fm_kernel,
        out_shape=jax.ShapeDtypeStruct((grid, tb), jnp.float32),
        grid=(grid,),
        in_specs=[
            pl.BlockSpec((n, tb), lambda i: (0, i)),              # x.T, tiled over batch
            pl.BlockSpec((n, 2), lambda i: (0, 0)),               # [w, 0.5*sum_k V^2]
            pl.BlockSpec((k, n), lambda i: (0, 0)),               # V.T (resident)
            pl.BlockSpec(memory_space=pltpu.MemorySpace.SMEM),    # bias scalar
        ],
        out_specs=pl.BlockSpec((1, tb), lambda i: (i, 0)),        # dense lane store
        compiler_params=pltpu.CompilerParams(
            dimension_semantics=("parallel",),
            vmem_limit_bytes=vmem_limit,
        ),
        cost_estimate=cost,
    )(xt, wh, vt, b)

    return out.reshape(-1)[:B].reshape(B, 1)


def fm_reference(x, w, b, v):
    """Pure-JAX reference mirroring the PyTorch forward."""
    linear_part = x @ w.T + b
    p1 = jnp.square(x @ v)
    p2 = jnp.square(x) @ jnp.square(v)
    out = linear_part + 0.5 * jnp.sum(p2 - p1, axis=1, keepdims=True)
    return jax.nn.sigmoid(out)


if __name__ == "__main__":
    n, k, B = 10, 5, 8

    key = jax.random.PRNGKey(0)
    kx, kw, kb, kv = jax.random.split(key, 4)

    # Deterministic inputs consistent with the module's shapes:
    #   nn.Linear(n, 1): weight (1, n), bias (1,) ; V: (n, k) uniform [-0.1, 0.1]
    x = jax.random.normal(kx, (B, n), dtype=jnp.float32)
    w = jax.random.uniform(kw, (1, n), minval=-0.3, maxval=0.3, dtype=jnp.float32)
    b = jax.random.uniform(kb, (1, 1), minval=-0.3, maxval=0.3, dtype=jnp.float32)
    v = jax.random.uniform(kv, (n, k), minval=-0.1, maxval=0.1, dtype=jnp.float32)

    logit = fm_forward(x, w, b, v)
    jax.block_until_ready(logit)

    ref = fm_reference(x, w, b, v)
    assert logit.shape == (B, 1)
    assert jnp.allclose(logit, ref, atol=1e-5, rtol=1e-5), "mismatch vs reference"

    print("KERNEL_OK")
</pallas_src>

<mosaic_0001>
module attributes {stable_mosaic.version = 11 : i64} {
  func.func @fm_kernel(%arg0: i32, %arg1: memref<10x8xf32, #tpu.memory_space<vmem>>, %arg2: memref<10x2xf32, #tpu.memory_space<vmem>>, %arg3: memref<5x10xf32, #tpu.memory_space<vmem>>, %arg4: memref<1x1xf32, #tpu.memory_space<smem>>, %arg5: memref<1x8xf32, #tpu.memory_space<vmem>>) attributes {dimension_semantics = [#tpu.dimension_semantics<parallel>], iteration_bounds = array<i64: 1>, scalar_prefetch = 0 : i64, scratch_operands = 0 : i64, tpu.core_type = #tpu.core_type<tc>, window_params = [{transform_indices = @transform_0, window_bounds = array<i64: 10, 8>}, {pipeline_mode = #tpu.pipeline_mode<synchronous>, transform_indices = @transform_1, window_bounds = array<i64: 10, 2>}, {pipeline_mode = #tpu.pipeline_mode<synchronous>, transform_indices = @transform_2, window_bounds = array<i64: 5, 10>}, {transform_indices = @transform_3, window_bounds = array<i64: 1, 1>}, {transform_indices = @transform_4, window_bounds = array<i64: 1, 8>}]} {
    %c0 = arith.constant 0 : index
    %c0_0 = arith.constant 0 : index
    %0 = vector.load %arg1[%c0, %c0_0] : memref<10x8xf32, #tpu.memory_space<vmem>>, vector<10x8xf32>
    %c0_1 = arith.constant 0 : index
    %c0_2 = arith.constant 0 : index
    %1 = vector.load %arg2[%c0_1, %c0_2] : memref<10x2xf32, #tpu.memory_space<vmem>>, vector<10x1xf32>
    %c0_3 = arith.constant 0 : index
    %c1 = arith.constant 1 : index
    %2 = vector.load %arg2[%c0_3, %c1] : memref<10x2xf32, #tpu.memory_space<vmem>>, vector<10x1xf32>
    %c0_4 = arith.constant 0 : index
    %c0_5 = arith.constant 0 : index
    %3 = memref.load %arg4[%c0_4, %c0_5] : memref<1x1xf32, #tpu.memory_space<smem>>
    %4 = vector.broadcast %2 : vector<10x1xf32> to vector<10x8xf32>
    %5 = arith.mulf %4, %0 : vector<10x8xf32>
    %6 = vector.broadcast %1 : vector<10x1xf32> to vector<10x8xf32>
    %7 = arith.addf %6, %5 : vector<10x8xf32>
    %8 = arith.mulf %0, %7 : vector<10x8xf32>
    %cst = arith.constant dense<0.000000e+00> : vector<8xf32>
    %9 = vector.multi_reduction <add>, %8, %cst [0] : vector<10x8xf32> to vector<8xf32>
    %10 = vector.shape_cast %9 : vector<8xf32> to vector<1x8xf32>
    %c0_6 = arith.constant 0 : index
    %c0_7 = arith.constant 0 : index
    %11 = vector.load %arg3[%c0_6, %c0_7] : memref<5x10xf32, #tpu.memory_space<vmem>>, vector<5x10xf32>
    %cst_8 = arith.constant dense<0.000000e+00> : vector<5x8xf32>
    %12 = tpu.matmul %11, %0, %cst_8 {dimension_numbers = #tpu.dot_dimension_numbers<[1], [0], [0], [1], [0, 0, 1, 1], [], []>} : vector<5x10xf32>, vector<10x8xf32>, vector<5x8xf32> -> vector<5x8xf32>
    %13 = arith.mulf %12, %12 : vector<5x8xf32>
    %cst_9 = arith.constant dense<0.000000e+00> : vector<8xf32>
    %14 = vector.multi_reduction <add>, %13, %cst_9 [0] : vector<5x8xf32> to vector<8xf32>
    %15 = vector.shape_cast %14 : vector<8xf32> to vector<1x8xf32>
    %cst_10 = arith.constant 5.000000e-01 : f32
    %16 = vector.broadcast %cst_10 : f32 to vector<1x8xf32>
    %17 = arith.mulf %16, %15 : vector<1x8xf32>
    %18 = arith.subf %10, %17 : vector<1x8xf32>
    %19 = vector.broadcast %3 : f32 to vector<1x8xf32>
    %20 = arith.addf %18, %19 : vector<1x8xf32>
    %21 = arith.negf %20 : vector<1x8xf32>
    %22 = math.exp %21 : vector<1x8xf32>
    %cst_11 = arith.constant 1.000000e+00 : f32
    %23 = vector.broadcast %cst_11 : f32 to vector<1x8xf32>
    %24 = arith.addf %23, %22 : vector<1x8xf32>
    %25 = arith.divf %23, %24 : vector<1x8xf32>
    %c0_12 = arith.constant 0 : index
    %c0_13 = arith.constant 0 : index
    %26 = vector.load %arg5[%c0_12, %c0_13] : memref<1x8xf32, #tpu.memory_space<vmem>>, vector<1x8xf32>
    tpu.vector_store %arg5[%c0_12, %c0_13], %25 {strides = array<i32>} : memref<1x8xf32, #tpu.memory_space<vmem>>, vector<1x8xf32>,
    return
  }
  func.func @transform_0(%arg0: i32) -> (i32, i32) {
    %c0_i32 = arith.constant 0 : i32
    %c0_i32_0 = arith.constant 0 : i32
    return %c0_i32, %arg0 : i32, i32
  }
  func.func @transform_1(%arg0: i32) -> (i32, i32) {
    %c0_i32 = arith.constant 0 : i32
    %c0_i32_0 = arith.constant 0 : i32
    %c0_i32_1 = arith.constant 0 : i32
    return %c0_i32, %c0_i32_0 : i32, i32
  }
  func.func @transform_2(%arg0: i32) -> (i32, i32) {
    %c0_i32 = arith.constant 0 : i32
    %c0_i32_0 = arith.constant 0 : i32
    %c0_i32_1 = arith.constant 0 : i32
    return %c0_i32, %c0_i32_0 : i32, i32
  }
  func.func @transform_3(%arg0: i32) -> (i32, i32) {
    %c0_i32 = arith.constant 0 : i32
    %c0_i32_0 = arith.constant 0 : i32
    %c0_i32_1 = arith.constant 0 : i32
    return %c0_i32, %c0_i32_0 : i32, i32
  }
  func.func @transform_4(%arg0: i32) -> (i32, i32) {
    %c0_i32 = arith.constant 0 : i32
    %c0_i32_0 = arith.constant 0 : i32
    return %arg0, %c0_i32 : i32, i32
  }
}

</mosaic_0001>

<llo_original>
// kernel: tpu_custom_call.1
$region0: #{tpu_custom_call.1}
  #allocation0 [shape = 'u32[]', space=smem, size = 0x4, offset = 0x4, fixed_abs, tag = 'smem constant byte address 0x4 - core index']
  #allocation1 [shape = 'u32[72,128]{1,0:T(1,128)}', space=vmem, size = 0x9000, scoped, tag = 'internal scratch']
  #allocation2 [shape = 'f32[1,1]{1,0:T(1,128)S(6)}', space=smem, size = 0x200, scoped, tag = 'scoped memory for tpu_custom_call.1']
  %s0 = inlined_call_operand.vmem [shape: f32[10,8], index: 0, kind: input, shape index: {}]
  %s1 = inlined_call_operand.vmem [shape: f32[10,2], index: 1, kind: input, shape index: {}]
  %s2 = inlined_call_operand.vmem [shape: f32[5,10], index: 2, kind: input, shape index: {}]
  %s3 = inlined_call_operand.<no memory space> [shape: f32[1,1], index: 3, kind: input, shape index: {}]
  %s4 = inlined_call_operand.hbm [shape: f32[1,8], index: 4, kind: output, shape index: {}]
  %s5 = sld [smem:[#allocation0]]
  $region26: #{tpu_custom_call.1} parent=0
    _
  %s7 = ssub.s32 1, %s5
  %s8 = scalar_select 0, %s7, %s5
  %9 = sst [smem:[#allocation2]] %s3
  $region1: #{tpu_custom_call.1} parent=0
    #allocation3 [shape = 'u8[512]{0}', space=vmem, size = 0x400, scoped, tag = 'output window, operand 0, single buffered']
    #allocation4 [shape = 's32[1]{0}', space=sflag, size = 0x4, scoped, tag = 'scoped memory for tpu_custom_call.1']
    %10 = vsyncpa [#allocation4], 0
    // Predicated region
    $region2: #{tpu_custom_call.1} parent=1 // pred_check
      _
    $region3: #{tpu_custom_call.1} parent=1 // pred_check_branch
      %12 = sbr.rel (0) target = $region5
    $region4: #{tpu_custom_call.1} parent=1 // pred_region
      _
    $region5: #{tpu_custom_call.1} parent=1 // pred_fallthru
      _
    // Predicated region
    $region6: #{tpu_custom_call.1} parent=1 // pred_check
      _
    $region7: #{tpu_custom_call.1} parent=1 // pred_check_branch
      %14 = sbr.rel (0) target = $region9
    $region8: #{tpu_custom_call.1} parent=1 // pred_region
      _
    $region9: #{tpu_custom_call.1} parent=1 // pred_fallthru
      _
    // Predicated region
    $region10: #{tpu_custom_call.1} parent=1 // pred_check
      _
    $region11: #{tpu_custom_call.1} parent=1 // pred_check_branch
      %16 = sbr.rel (0) target = $region13
    $region12: #{tpu_custom_call.1} parent=1 // pred_region
      _
    $region13: #{tpu_custom_call.1} parent=1 // pred_fallthru
      _
    // Predicated region
    $region14: #{tpu_custom_call.1} parent=1 // pred_check
      _
    $region15: #{tpu_custom_call.1} parent=1 // pred_check_branch
      %18 = sbr.rel (0) target = $region17
    $region16: #{tpu_custom_call.1} parent=1 // pred_region
      _
    $region17: #{tpu_custom_call.1} parent=1 // pred_fallthru
      _
    %v19 = vld [vmem:[%s0] sm:$0xff]
    %v20 = vld [vmem:[%s0 + $0x8] sm:$0x3]
    %v21 = vld [vmem:[%s1] sm:$0xff]
    %v22 = vld [vmem:[%s1 + $0x8] sm:$0x3]
    %s23 = sld [smem:[#allocation2]]
    %25 = vset.pattern.permute.xlu0 1
    %26 = vperm.xlu0 %25, %v21
    %v27 = vpop.permute.xlu0 %26
    %30 = vset.pattern.permute.xlu0 1
    %31 = vperm.xlu0 %30, %v22
    %v32 = vpop.permute.xlu0 %31
    %v34 = vmul.f32 %v27, %v19
    %v35 = vmul.f32 %v32, %v20
    %36 = vset.pattern.permute.xlu0 0
    %37 = vperm.xlu0 %36, %v21
    %v38 = vpop.permute.xlu0 %37
    %40 = vset.pattern.permute.xlu0 0
    %41 = vperm.xlu0 %40, %v22
    %v42 = vpop.permute.xlu0 %41
    %v44 = vadd.f32 %v38, %v34
    %v45 = vadd.f32 %v42, %v35
    %v46 = vmul.f32 %v19, %v44
    %v47 = vmul.f32 %v20, %v45
    %vm48 = vcmask 64512
    %v49 = vsel %vm48, %v46, 0.0
    %vm50 = vcmask 58368
    %v51 = vsel %vm50, %v47, 0.0
    %v52 = vadd.f32 %v49, %v51
    %v53 = vrot.slane %v52, 4
    %v54 = vadd.f32 %v52, %v53
    %v55 = vrot.slane %v54, 2
    %v56 = vadd.f32 %v54, %v55
    %v57 = vrot.slane %v56, 1
    %v58 = vadd.f32 %v56, %v57
    %v59 = vld [vmem:[%s2] sm:$0x1f]
    %vm60 = vcmask 80896
    %v62 = vsel %vm60, %v59, 0
    %vm64 = vcmask 1041408
    %v66 = vsel %vm64, %v20, 0
    %68 = vmatpush.msra.mxu0 0.0
    %69 = vmatpush.msra.mxu0 0.0
    %70 = vmatpush.msra.mxu0 0.0
    %71 = vmatpush.msra.mxu0 0.0
    %72 = vmatpush.msra.mxu0 0.0
    %73 = vmatpush.msra.mxu0 0.0
    %74 = vmatpush.msra.mxu0 0.0
    %75 = vmatpush.msra.mxu0 0.0
    %76 = vmatpush.msra.mxu0 0.0
    %77 = vmatpush.msra.mxu0 0.0
    %78 = vmatpush.msra.mxu0 0.0
    %79 = vmatpush.msra.mxu0 0.0
    %80 = vmatpush.msra.mxu0 0.0
    %81 = vmatpush.msra.mxu0 0.0
    %82 = vmatpush.msra.mxu0 %v66
    %83 = vmatpush.msra.mxu0 %v19
    %84 = vmatmul.f32.gmra.mxu0 %v62
    %v85 = vpop.f32.mrf.mxu0
    %v86 = vadd.f32 0.0, %v85
    %87 = vdwg.mxu0
    %v88 = vmul.f32 %v86, %v86
    %vm89 = vcmask 61440
    %v90 = vsel %vm89, %v88, 0.0
    %v91 = vrot.slane %v90, 4
    %v92 = vadd.f32 %v90, %v91
    %v93 = vrot.slane %v92, 2
    %v94 = vadd.f32 %v92, %v93
    %v95 = vrot.slane %v94, 1
    %v96 = vadd.f32 %v94, %v95
    %v97 = vmul.f32 %v96, 0.5
    %v98 = vsub.f32 %v58, %v97
    %v99 = vstv %s23
    %v100 = vadd.f32 %v98, %v99
    %v101 = vxor.u32 %v100, 2147483648
    %v102 = vmul.f32 %v101, 1.442695
    %v103 = vpow.pop %v102
    %v104 = vadd.f32 %v103, 1.0
    %v105 = vrcp.pop %v104
    %v106 = vmul.f32 %v104, %v105
    %v107 = vsub.f32 1.0, %v106
    %v108 = vmul.f32 %v105, %v107
    %v109 = vadd.f32 %v105, %v108
    %vm110 = vweird.f32 %v104
    %vm111 = vweird.f32 %v105
    %vm112 = vmor %vm110, %vm111
    %v113 = vsel %vm112, %v105, %v109
    %v114 = vand.u32 2147483647, %v104
    %vm115 = vcmp.eq.f32.partialorder %v114, 8.507059e+37
    %v116 = vand.u32 %v104, 2147483648
    %v117 = vor.u32 1.1754944e-38, %v116
    %v118 = vsel %vm115, %v117, %v113
    %v119 = vmul.f32 1.0, %v118
    %vm120 = vcmask 57344
    %121 = vst.msk [vmem:[#allocation3] sm:$0x1] %vm120, %v119
    // Predicated region
    $region18: #{tpu_custom_call.1} parent=1 // pred_check
      _
    $region19: #{tpu_custom_call.1} parent=1 // pred_check_branch
      %123 = sbr.rel (0) target = $region21
    $region20: #{tpu_custom_call.1} parent=1 // pred_region
      %125 = vsyncadd [#allocation4], 0
      %s127 = sshll.u32 [#allocation3], 4
      %s128 = int_to_ptr.vmem [resolvable:$true] %s127
      %s129 = sshll.u32 %s4, 4
      %s130 = int_to_ptr.hbm [resolvable:$true] %s129
      %132 = dma.vmem_to_hbm [thread:$0]  %s128, 16, %s130, [#allocation4]
    $region21: #{tpu_custom_call.1} parent=1 // pred_fallthru
      _
    // Predicated region
    $region22: #{tpu_custom_call.1} parent=1 // pred_check
      _
    $region23: #{tpu_custom_call.1} parent=1 // pred_check_branch
      %134 = sbr.rel (0) target = $region25
    $region24: #{tpu_custom_call.1} parent=1 // pred_region
      %136 = dma.done [#allocation4], 16
    $region25: #{tpu_custom_call.1} parent=1 // pred_fallthru
      _
    %137 = vsyncpa [#allocation4], 1

</llo_original>
